<compile_context>
chip_gen: v5e
topology: v5e:2x2
jax: 0.10.0
libtpu: 0.0.40
codegen_flags: <defaults>
</compile_context>

<pallas_src>
import math
from functools import partial, lru_cache

import jax
import jax.numpy as jnp
from jax.experimental import pallas as pl
from jax.experimental.pallas import tpu as pltpu


# ---------------------------------------------------------------------------
# helpers
# ---------------------------------------------------------------------------

def _round_up(x, m):
    return ((x + m - 1) // m) * m


@lru_cache(maxsize=None)
def _vmem_limit_bytes():
    """~3/4 of physical VMEM, capped at 96 MiB (safe headroom on v5e/v6e/v7x)."""
    try:
        info = pltpu.get_tpu_info()
        cap = int(getattr(info, "vmem_capacity_bytes", 128 * 1024 * 1024))
    except Exception:
        cap = 64 * 1024 * 1024
    return int(min(cap * 3 // 4, 96 * 1024 * 1024))


def _compiler_params(semantics):
    return pltpu.CompilerParams(
        dimension_semantics=semantics,
        vmem_limit_bytes=_vmem_limit_bytes())


# ---------------------------------------------------------------------------
# tiled linear kernels (x @ W [+ b])
# ---------------------------------------------------------------------------

def _linear_kernel(x_ref, w_ref, o_ref, acc_ref):
    @pl.when(pl.program_id(2) == 0)
    def _():
        acc_ref[...] = jnp.zeros_like(acc_ref)

    acc_ref[...] += jnp.dot(x_ref[...], w_ref[...],
                            preferred_element_type=jnp.float32)

    @pl.when(pl.program_id(2) == pl.num_programs(2) - 1)
    def _():
        o_ref[...] = acc_ref[...].astype(o_ref.dtype)


def _linear_bias_kernel(x_ref, w_ref, b_ref, o_ref, acc_ref):
    @pl.when(pl.program_id(2) == 0)
    def _():
        acc_ref[...] = jnp.zeros_like(acc_ref)

    acc_ref[...] += jnp.dot(x_ref[...], w_ref[...],
                            preferred_element_type=jnp.float32)

    @pl.when(pl.program_id(2) == pl.num_programs(2) - 1)
    def _():
        # bias add hoisted out of the K reduction loop (finalize only)
        o_ref[...] = (acc_ref[...] + b_ref[...].astype(jnp.float32)
                      ).astype(o_ref.dtype)


def pallas_linear(x2d, w_t, bias=None, *,
                  tm_target=256, tn_target=256, tk_target=512):
    """x2d: (M, K) @ w_t: (K, N) [+ bias (1, N)] -> (M, N); tiled + pipelined."""
    M, K = x2d.shape
    N = w_t.shape[1]

    # full-dim blocks for small dims (always layout-legal), aligned tiles otherwise
    tm = M if M <= tm_target else tm_target
    tn = N if N <= tn_target else tn_target
    tk = K if K <= tk_target else tk_target

    Mp, Kp, Np = _round_up(M, tm), _round_up(K, tk), _round_up(N, tn)
    if (Mp, Kp) != (M, K):
        x2d = jnp.pad(x2d, ((0, Mp - M), (0, Kp - K)))
    if (Kp, Np) != (K, N):
        w_t = jnp.pad(w_t, ((0, Kp - K), (0, Np - N)))

    in_specs = [
        pl.BlockSpec((tm, tk), lambda i, j, k: (i, k)),
        pl.BlockSpec((tk, tn), lambda i, j, k: (k, j)),
    ]
    operands = [x2d, w_t]
    kernel = _linear_kernel
    if bias is not None:
        if Np != N:
            bias = jnp.pad(bias, ((0, 0), (0, Np - N)))
        in_specs.append(pl.BlockSpec((1, tn), lambda i, j, k: (0, j)))
        operands.append(bias)
        kernel = _linear_bias_kernel

    out = pl.pallas_call(
        kernel,
        out_shape=jax.ShapeDtypeStruct((Mp, Np), x2d.dtype),
        grid_spec=pltpu.PrefetchScalarGridSpec(
            num_scalar_prefetch=0,
            grid=(Mp // tm, Np // tn, Kp // tk),
            in_specs=in_specs,
            out_specs=pl.BlockSpec((tm, tn), lambda i, j, k: (i, j)),
            scratch_shapes=[pltpu.VMEM((tm, tn), jnp.float32)]),
        compiler_params=_compiler_params(("parallel", "parallel", "arbitrary")),
    )(*operands)

    if (Mp, Np) != (M, N):
        out = out[:M, :N]
    return out


# ---------------------------------------------------------------------------
# flash-style multi-head attention kernel (merged-head layout, fused KV input)
# ---------------------------------------------------------------------------

def _flash_attn_kernel(q_ref, kv_ref, o_ref, m_sc, l_sc, acc_sc, *,
                       heads, dim_head, scale, kv_len, tk):
    ki = pl.program_id(2)
    inner = heads * dim_head

    @pl.when(ki == 0)
    def _():
        m_sc[...] = jnp.full_like(m_sc, -jnp.inf)
        l_sc[...] = jnp.zeros_like(l_sc)
        acc_sc[...] = jnp.zeros_like(acc_sc)

    # scale folded into q (touches tq*inner, not tq*tk)
    q_t = q_ref[0] * scale                 # (tq, heads*dh)
    kv_t = kv_ref[0]                       # (tk, 2*heads*dh)  [K | V]

    col_valid = None
    if kv_len is not None:                 # only emitted when Nk was padded
        col = ki * tk + jax.lax.broadcasted_iota(jnp.int32, (1, tk), 1)
        col_valid = col < kv_len

    for h in range(heads):                 # static unroll over heads
        lo = h * dim_head
        q_h = q_t[:, lo:lo + dim_head]                       # (tq, dh)
        k_h = kv_t[:, lo:lo + dim_head]                      # (tk, dh)
        v_h = kv_t[:, inner + lo:inner + lo + dim_head]      # (tk, dh)

        # q @ k^T without forming a transpose: contract the dh axis of both.
        s = jax.lax.dot_general(
            q_h, k_h, dimension_numbers=(((1,), (1,)), ((), ())),
            preferred_element_type=jnp.float32)              # (tq, tk)
        if col_valid is not None:
            s = jnp.where(col_valid, s, -1e30)

        m_prev = m_sc[h]                                     # (tq, 1)
        m_new = jnp.maximum(m_prev, jnp.max(s, axis=-1, keepdims=True))
        alpha = jnp.exp(m_prev - m_new)
        p = jnp.exp(s - m_new)                               # (tq, tk)
        l_sc[h] = alpha * l_sc[h] + jnp.sum(p, axis=-1, keepdims=True)
        acc_sc[h] = alpha * acc_sc[h] + jnp.dot(
            p.astype(v_h.dtype), v_h, preferred_element_type=jnp.float32)
        m_sc[h] = m_new

    @pl.when(ki == pl.num_programs(2) - 1)
    def _():
        # deferred softmax normalisation on the (tq, dh) accumulator (EUP recip),
        # then a single lane-dense merged-head store (tq, heads*dh).
        outs = []
        for h in range(heads):
            inv_l = pl.reciprocal(l_sc[h], approx=True)      # (tq, 1)
            outs.append(acc_sc[h] * inv_l)                   # (tq, dh)
        o_ref[0] = jnp.concatenate(outs, axis=-1).astype(o_ref.dtype)


def pallas_flash_attention(q, kv, *, heads, dim_head,
                           tq_target=256, tk_target=512):
    """q: (B, Nq, heads*dh), kv: (B, Nk, 2*heads*dh) -> (B, Nq, heads*dh)."""
    B, Nq, inner = q.shape
    Nk = kv.shape[1]
    assert inner == heads * dim_head and kv.shape[2] == 2 * inner
    scale = 1.0 / math.sqrt(dim_head)

    tq = Nq if Nq <= tq_target else tq_target
    tk = Nk if Nk <= tk_target else tk_target
    Nq_p, Nk_p = _round_up(Nq, tq), _round_up(Nk, tk)
    if Nq_p != Nq:
        q = jnp.pad(q, ((0, 0), (0, Nq_p - Nq), (0, 0)))
    if Nk_p != Nk:
        kv = jnp.pad(kv, ((0, 0), (0, Nk_p - Nk), (0, 0)))
    kv_len = Nk if Nk_p != Nk else None    # mask only needed when padded

    kernel = partial(_flash_attn_kernel, heads=heads, dim_head=dim_head,
                     scale=scale, kv_len=kv_len, tk=tk)
    out = pl.pallas_call(
        kernel,
        out_shape=jax.ShapeDtypeStruct((B, Nq_p, inner), q.dtype),
        grid_spec=pltpu.PrefetchScalarGridSpec(
            num_scalar_prefetch=0,
            grid=(B, Nq_p // tq, Nk_p // tk),
            in_specs=[
                pl.BlockSpec((1, tq, inner), lambda b, qi, ki: (b, qi, 0)),
                pl.BlockSpec((1, tk, 2 * inner), lambda b, qi, ki: (b, ki, 0)),
            ],
            out_specs=pl.BlockSpec((1, tq, inner), lambda b, qi, ki: (b, qi, 0)),
            scratch_shapes=[
                pltpu.VMEM((heads, tq, 1), jnp.float32),         # running max
                pltpu.VMEM((heads, tq, 1), jnp.float32),         # running denom
                pltpu.VMEM((heads, tq, dim_head), jnp.float32),  # running numer
            ]),
        compiler_params=_compiler_params(("parallel", "parallel", "arbitrary")),
    )(q, kv)

    if Nq_p != Nq:
        out = out[:, :Nq, :]
    return out


# ---------------------------------------------------------------------------
# module equivalent
# ---------------------------------------------------------------------------

def init_params(key, query_dim, context_dim=None, heads=8, dim_head=64,
                dtype=jnp.float32):
    context_dim = query_dim if context_dim is None else context_dim
    inner_dim = heads * dim_head
    k1, k2, k3, k4, k5 = jax.random.split(key, 5)
    scale = 0.02
    # weights stored pre-transposed: (in_features, out_features)
    return {
        "w_q": jax.random.normal(k1, (query_dim, inner_dim), dtype) * scale,
        "w_k": jax.random.normal(k2, (context_dim, inner_dim), dtype) * scale,
        "w_v": jax.random.normal(k3, (context_dim, inner_dim), dtype) * scale,
        "w_out": jax.random.normal(k4, (inner_dim, query_dim), dtype) * scale,
        "b_out": jax.random.normal(k5, (1, query_dim), dtype) * scale,
    }


def memory_efficient_cross_attention(params, x, context=None, *, heads, dim_head):
    """x: (B, Nq, query_dim), context: (B, Nk, context_dim) or None."""
    if context is None:
        context = x
    B, Nq, _ = x.shape
    Nk = context.shape[1]
    inner = heads * dim_head

    # Q projection, and fused K|V projection (one matmul, context read once).
    w_kv = jnp.concatenate([params["w_k"], params["w_v"]], axis=1)
    q = pallas_linear(x.reshape(B * Nq, -1), params["w_q"]).reshape(B, Nq, inner)
    kv = pallas_linear(context.reshape(B * Nk, -1), w_kv).reshape(B, Nk, 2 * inner)

    # flash attention; heads sliced inside the kernel, output already merged.
    attn = pallas_flash_attention(q, kv, heads=heads, dim_head=dim_head)

    # to_out: Linear(inner, query_dim) + Dropout(0.0) (identity at inference)
    out = pallas_linear(attn.reshape(B * Nq, inner),
                        params["w_out"], params["b_out"])
    return out.reshape(B, Nq, -1)


# ---------------------------------------------------------------------------
# main
# ---------------------------------------------------------------------------

if __name__ == "__main__":
    query_dim = 32
    context_dim = 32
    heads = 4
    dim_head = 8
    B, Nq, Nk = 2, 8, 8

    key = jax.random.PRNGKey(0)
    kp, kx, kc = jax.random.split(key, 3)

    params = init_params(kp, query_dim, context_dim, heads, dim_head)
    x = jax.random.normal(kx, (B, Nq, query_dim), jnp.float32)
    context = jax.random.normal(kc, (B, Nk, context_dim), jnp.float32)

    out = memory_efficient_cross_attention(
        params, x, context, heads=heads, dim_head=dim_head)
    jax.block_until_ready(out)

    # pure-JAX reference (mirrors the PyTorch forward)
    def ref(params, x, context):
        q = x @ params["w_q"]
        k = context @ params["w_k"]
        v = context @ params["w_v"]

        def sh(t):
            b, n, _ = t.shape
            return (t.reshape(b, n, heads, dim_head)
                     .transpose(0, 2, 1, 3)
                     .reshape(b * heads, n, dim_head))

        qh, kh, vh = sh(q), sh(k), sh(v)
        s = jnp.einsum("bqd,bkd->bqk", qh, kh) / math.sqrt(dim_head)
        p = jax.nn.softmax(s, axis=-1)
        o = jnp.einsum("bqk,bkd->bqd", p, vh)
        o = (o.reshape(x.shape[0], heads, -1, dim_head)
              .transpose(0, 2, 1, 3)
              .reshape(x.shape[0], -1, heads * dim_head))
        return o @ params["w_out"] + params["b_out"][0]

    expected = ref(params, x, context)
    assert out.shape == (B, Nq, query_dim)
    # tolerance covers the EUP approximate-reciprocal softmax normalisation
    assert jnp.allclose(out, expected, atol=1e-3, rtol=1e-3), (
        float(jnp.max(jnp.abs(out - expected))))

    print("KERNEL_OK")
</pallas_src>

<mosaic_0001>
module attributes {stable_mosaic.version = 11 : i64} {
  func.func @_linear_kernel(%arg0: i32, %arg1: i32, %arg2: i32, %arg3: memref<16x32xf32, #tpu.memory_space<vmem>>, %arg4: memref<32x32xf32, #tpu.memory_space<vmem>>, %arg5: memref<16x32xf32, #tpu.memory_space<vmem>>, %arg6: memref<16x32xf32, #tpu.memory_space<vmem>>) attributes {dimension_semantics = [#tpu.dimension_semantics<parallel>, #tpu.dimension_semantics<parallel>, #tpu.dimension_semantics<arbitrary>], iteration_bounds = array<i64: 1, 1, 1>, scalar_prefetch = 0 : i64, scratch_operands = 1 : i64, tpu.core_type = #tpu.core_type<tc>, window_params = [{transform_indices = @transform_0, window_bounds = array<i64: 16, 32>}, {transform_indices = @transform_1, window_bounds = array<i64: 32, 32>}, {transform_indices = @transform_2, window_bounds = array<i64: 16, 32>}]} {
    %c0_i32 = arith.constant 0 : i32
    %0 = arith.cmpi eq, %arg2, %c0_i32 : i32
    %1 = arith.extui %0 : i1 to i32
    %c0_i32_0 = arith.constant 0 : i32
    %2 = arith.cmpi ne, %1, %c0_i32_0 : i32
    scf.if %2 {
      %cst_10 = arith.constant 0.000000e+00 : f32
      %12 = vector.broadcast %cst_10 : f32 to vector<16x32xf32>
      %c0_11 = arith.constant 0 : index
      %c0_12 = arith.constant 0 : index
      %13 = vector.load %arg6[%c0_11, %c0_12] : memref<16x32xf32, #tpu.memory_space<vmem>>, vector<16x32xf32>
      tpu.vector_store %arg6[%c0_11, %c0_12], %12 {strides = array<i32>} : memref<16x32xf32, #tpu.memory_space<vmem>>, vector<16x32xf32>,
    } else {
    }
    %c0 = arith.constant 0 : index
    %c0_1 = arith.constant 0 : index
    %3 = vector.load %arg6[%c0, %c0_1] : memref<16x32xf32, #tpu.memory_space<vmem>>, vector<16x32xf32>
    %c0_2 = arith.constant 0 : index
    %c0_3 = arith.constant 0 : index
    %4 = vector.load %arg3[%c0_2, %c0_3] : memref<16x32xf32, #tpu.memory_space<vmem>>, vector<16x32xf32>
    %c0_4 = arith.constant 0 : index
    %c0_5 = arith.constant 0 : index
    %5 = vector.load %arg4[%c0_4, %c0_5] : memref<32x32xf32, #tpu.memory_space<vmem>>, vector<32x32xf32>
    %cst = arith.constant dense<0.000000e+00> : vector<16x32xf32>
    %6 = tpu.matmul %4, %5, %cst {dimension_numbers = #tpu.dot_dimension_numbers<[1], [0], [0], [1], [0, 0, 1, 1], [], []>} : vector<16x32xf32>, vector<32x32xf32>, vector<16x32xf32> -> vector<16x32xf32>
    %7 = arith.addf %3, %6 : vector<16x32xf32>
    %c0_6 = arith.constant 0 : index
    %c0_7 = arith.constant 0 : index
    %8 = vector.load %arg6[%c0_6, %c0_7] : memref<16x32xf32, #tpu.memory_space<vmem>>, vector<16x32xf32>
    tpu.vector_store %arg6[%c0_6, %c0_7], %7 {strides = array<i32>} : memref<16x32xf32, #tpu.memory_space<vmem>>, vector<16x32xf32>,
    %c0_i32_8 = arith.constant 0 : i32
    %9 = arith.cmpi eq, %arg2, %c0_i32_8 : i32
    %10 = arith.extui %9 : i1 to i32
    %c0_i32_9 = arith.constant 0 : i32
    %11 = arith.cmpi ne, %10, %c0_i32_9 : i32
    scf.if %11 {
      %c0_10 = arith.constant 0 : index
      %c0_11 = arith.constant 0 : index
      %12 = vector.load %arg6[%c0_10, %c0_11] : memref<16x32xf32, #tpu.memory_space<vmem>>, vector<16x32xf32>
      %c0_12 = arith.constant 0 : index
      %c0_13 = arith.constant 0 : index
      %13 = vector.load %arg5[%c0_12, %c0_13] : memref<16x32xf32, #tpu.memory_space<vmem>>, vector<16x32xf32>
      tpu.vector_store %arg5[%c0_12, %c0_13], %12 {strides = array<i32>} : memref<16x32xf32, #tpu.memory_space<vmem>>, vector<16x32xf32>,
    } else {
    }
    return
  }
  func.func @transform_0(%arg0: i32, %arg1: i32, %arg2: i32) -> (i32, i32) {
    %c0_i32 = arith.constant 0 : i32
    return %arg0, %arg2 : i32, i32
  }
  func.func @transform_1(%arg0: i32, %arg1: i32, %arg2: i32) -> (i32, i32) {
    %c0_i32 = arith.constant 0 : i32
    return %arg2, %arg1 : i32, i32
  }
  func.func @transform_2(%arg0: i32, %arg1: i32, %arg2: i32) -> (i32, i32) {
    %c0_i32 = arith.constant 0 : i32
    return %arg0, %arg1 : i32, i32
  }
}

</mosaic_0001>

<llo_original>
// kernel: tpu_custom_call.1
$region0: #{tpu_custom_call.1}
  #allocation0 [shape = 'u32[]', space=smem, size = 0x4, offset = 0x4, fixed_abs, tag = 'smem constant byte address 0x4 - core index']
  #allocation1 [shape = 'u32[72,128]{1,0:T(1,128)}', space=vmem, size = 0x9000, scoped, tag = 'internal scratch']
  #allocation2 [shape = 'f32[16,32]{1,0:T(8,128)}', space=vmem, size = 0x2000, scoped, tag = 'scratch operand']
  %s0 = inlined_call_operand.hbm [shape: f32[16,32], index: 0, kind: input, shape index: {}]
  %s1 = inlined_call_operand.hbm [shape: f32[32,32], index: 1, kind: input, shape index: {}]
  %s2 = inlined_call_operand.hbm [shape: f32[16,32], index: 2, kind: output, shape index: {}]
  %s3 = sld [smem:[#allocation0]]
  $region34: #{tpu_custom_call.1} parent=0
    _
  %s5 = ssub.s32 1, %s3
  %s6 = scalar_select 0, %s5, %s3
  $region1: #{tpu_custom_call.1} parent=0
    #allocation3 [shape = 'u8[8192]{0}', space=vmem, size = 0x2000, scoped, tag = 'input window, operand 0, single buffered']
    #allocation4 [shape = 's32[1]{0}', space=sflag, size = 0x4, scoped, tag = 'scoped memory for tpu_custom_call.1']
    #allocation5 [shape = 's32[1]{0}', space=sflag, size = 0x4, scoped, tag = 'scoped memory for tpu_custom_call.1']
    #allocation6 [shape = 'u8[16384]{0}', space=vmem, size = 0x4000, scoped, tag = 'input window, operand 1, single buffered']
    #allocation7 [shape = 's32[1]{0}', space=sflag, size = 0x4, scoped, tag = 'scoped memory for tpu_custom_call.1']
    #allocation8 [shape = 'u8[8192]{0}', space=vmem, size = 0x2000, scoped, tag = 'output window, operand 0, single buffered']
    %7 = vsyncpa [#allocation4], 0
    %8 = vsyncpa [#allocation7], 0
    %9 = vsyncpa [#allocation5], 0
    // Predicated region
    $region2: #{tpu_custom_call.1} parent=1 // pred_check
      _
    $region3: #{tpu_custom_call.1} parent=1 // pred_check_branch
      %11 = sbr.rel (0) target = $region5
    $region4: #{tpu_custom_call.1} parent=1 // pred_region
      %13 = vsyncadd [#allocation4], 0
      %s14 = sshll.u32 %s0, 4
      %s15 = int_to_ptr.hbm [resolvable:$true] %s14
      %s16 = sshll.u32 [#allocation3], 4
      %s17 = int_to_ptr.vmem [resolvable:$true] %s16
      %22 = dma.hbm_to_vmem [thread:$0]  %s15, 256, %s17, [#allocation4], 128, 128, 8
    $region5: #{tpu_custom_call.1} parent=1 // pred_fallthru
      _
    // Predicated region
    $region6: #{tpu_custom_call.1} parent=1 // pred_check
      _
    $region7: #{tpu_custom_call.1} parent=1 // pred_check_branch
      %24 = sbr.rel (0) target = $region9
    $region8: #{tpu_custom_call.1} parent=1 // pred_region
      %26 = vsyncadd [#allocation7], 0
      %s27 = sshll.u32 %s1, 4
      %s28 = int_to_ptr.hbm [resolvable:$true] %s27
      %s29 = sshll.u32 [#allocation6], 4
      %s30 = int_to_ptr.vmem [resolvable:$true] %s29
      %35 = dma.hbm_to_vmem [thread:$0]  %s28, 512, %s30, [#allocation7], 128, 128, 8
    $region9: #{tpu_custom_call.1} parent=1 // pred_fallthru
      _
    // Predicated region
    $region10: #{tpu_custom_call.1} parent=1 // pred_check
      _
    $region11: #{tpu_custom_call.1} parent=1 // pred_check_branch
      %37 = sbr.rel (0) target = $region13
    $region12: #{tpu_custom_call.1} parent=1 // pred_region
      %39 = dma.done [#allocation4], 256
    $region13: #{tpu_custom_call.1} parent=1 // pred_fallthru
      _
    // Predicated region
    $region14: #{tpu_custom_call.1} parent=1 // pred_check
      _
    $region15: #{tpu_custom_call.1} parent=1 // pred_check_branch
      %41 = sbr.rel (0) target = $region17
    $region16: #{tpu_custom_call.1} parent=1 // pred_region
      %43 = dma.done [#allocation7], 512
    $region17: #{tpu_custom_call.1} parent=1 // pred_fallthru
      _
    %p44 = scmp.eq.s32.totalorder 0, 0
    // Predicated region
    $region18: #{tpu_custom_call.1} parent=1 // pred_check
      %p45 = pneg %p44
    $region19: #{tpu_custom_call.1} parent=1 // pred_check_branch
      %47 = sbr.rel (%p45) target = $region21
    $region20: #{tpu_custom_call.1} parent=1 // pred_region
      %vm48 = vcmask 261120
      %49 = vst.msk [vmem:[#allocation2] sm:$0xff] %vm48, 0.0
      %50 = vst.msk [vmem:[#allocation2 + $0x8] sm:$0xff] %vm48, 0.0
    $region21: #{tpu_custom_call.1} parent=1 // pred_fallthru
      _
    %v51 = vld [vmem:[#allocation2] sm:$0xff]
    %v52 = vld [vmem:[#allocation2 + $0x8] sm:$0xff]
    %v53 = vld [vmem:[#allocation3] sm:$0xff]
    %v54 = vld [vmem:[#allocation3 + $0x8] sm:$0xff]
    %v55 = vld [vmem:[#allocation6] sm:$0xff]
    %v56 = vld [vmem:[#allocation6 + $0x8] sm:$0xff]
    %v57 = vld [vmem:[#allocation6 + $0x10] sm:$0xff]
    %v58 = vld [vmem:[#allocation6 + $0x18] sm:$0xff]
    %vm59 = vcmask 261120
    %v61 = vsel %vm59, %v53, 0
    %v64 = vsel %vm59, %v54, 0
    %66 = vmatpush.msra.mxu0 0.0
    %67 = vmatpush.msra.mxu0 0.0
    %68 = vmatpush.msra.mxu0 0.0
    %69 = vmatpush.msra.mxu0 0.0
    %70 = vmatpush.msra.mxu0 0.0
    %71 = vmatpush.msra.mxu0 0.0
    %72 = vmatpush.msra.mxu0 0.0
    %73 = vmatpush.msra.mxu0 0.0
    %74 = vmatpush.msra.mxu0 0.0
    %75 = vmatpush.msra.mxu0 0.0
    %76 = vmatpush.msra.mxu0 0.0
    %77 = vmatpush.msra.mxu0 0.0
    %78 = vmatpush.msra.mxu0 %v58
    %79 = vmatpush.msra.mxu0 %v57
    %80 = vmatpush.msra.mxu0 %v56
    %81 = vmatpush.msra.mxu0 %v55
    %82 = vmatmul.f32.gmra.mxu0 %v61
    %v83 = vpop.f32.mrf.mxu0
    %v84 = vadd.f32 0.0, %v83
    %85 = vmatmul.f32.gmra.mxu0 %v64
    %v86 = vpop.f32.mrf.mxu0
    %v87 = vadd.f32 0.0, %v86
    %88 = vdwg.mxu0
    %v89 = vadd.f32 %v51, %v84
    %v90 = vadd.f32 %v52, %v87
    %91 = vst.msk [vmem:[#allocation2] sm:$0xff] %vm59, %v89
    %92 = vst.msk [vmem:[#allocation2 + $0x8] sm:$0xff] %vm59, %v90
    // Predicated region
    $region22: #{tpu_custom_call.1} parent=1 // pred_check
      %p93 = pneg %p44
    $region23: #{tpu_custom_call.1} parent=1 // pred_check_branch
      %95 = sbr.rel (%p93) target = $region25
    $region24: #{tpu_custom_call.1} parent=1 // pred_region
      %v96 = vld [vmem:[#allocation2] sm:$0xff]
      %v97 = vld [vmem:[#allocation2 + $0x8] sm:$0xff]
      %98 = vst.msk [vmem:[#allocation8] sm:$0xff] %vm59, %v96
      %99 = vst.msk [vmem:[#allocation8 + $0x8] sm:$0xff] %vm59, %v97
    $region25: #{tpu_custom_call.1} parent=1 // pred_fallthru
      _
    // Predicated region
    $region26: #{tpu_custom_call.1} parent=1 // pred_check
      _
    $region27: #{tpu_custom_call.1} parent=1 // pred_check_branch
      %101 = sbr.rel (0) target = $region29
    $region28: #{tpu_custom_call.1} parent=1 // pred_region
      %103 = vsyncadd [#allocation5], 0
      %s104 = sshll.u32 [#allocation8], 4
      %s105 = int_to_ptr.vmem [resolvable:$true] %s104
      %s106 = sshll.u32 %s2, 4
      %s107 = int_to_ptr.hbm [resolvable:$true] %s106
      %112 = dma.vmem_to_hbm [thread:$0]  %s105, 256, %s107, [#allocation5], 128, 128, 8
    $region29: #{tpu_custom_call.1} parent=1 // pred_fallthru
      _
    // Predicated region
    $region30: #{tpu_custom_call.1} parent=1 // pred_check
      _
    $region31: #{tpu_custom_call.1} parent=1 // pred_check_branch
      %114 = sbr.rel (0) target = $region33
    $region32: #{tpu_custom_call.1} parent=1 // pred_region
      %116 = dma.done [#allocation5], 256
    $region33: #{tpu_custom_call.1} parent=1 // pred_fallthru
      _
    %117 = vsyncpa [#allocation4], 1
    %118 = vsyncpa [#allocation7], 1
    %119 = vsyncpa [#allocation5], 1

</llo_original>
